<compile_context>
chip_gen: v7x
topology: tpu7x:2x2x1
jax: 0.10.0
libtpu: 0.0.40
codegen_flags: <defaults>
</compile_context>

<pallas_src>
from functools import partial

import jax
import jax.numpy as jnp
from jax.experimental import pallas as pl
from jax.experimental.pallas import tpu as pltpu


def _gate_kernel(fiber, *refs):
    """Elementwise hot path: silu on type-0 remainder, sigmoid-gating for l>0.

    All refs are laid out with the flattened batch axis N on lanes (last dim).
    """
    num_degrees = len(fiber)
    num_hi = num_degrees - 1
    dim_gate = sum(fiber[1:])

    t0_ref = refs[0]
    x_refs = refs[1:1 + num_hi]
    out0_ref = refs[1 + num_hi]
    out_refs = refs[2 + num_hi:]

    t0 = t0_ref[...]                                    # (type0_dim, nb)

    # output[0] = silu(remaining type-0 channels)
    rem = t0[dim_gate:, :]                              # (rem_dim, nb)
    out0_ref[...] = rem * jax.nn.sigmoid(rem)

    # output[l] = x[l] * sigmoid(gate_l), gate broadcast along m (leading axis)
    off = 0
    for i in range(num_hi):
        d = fiber[i + 1]
        g = jax.nn.sigmoid(t0[off:off + d, :])          # (d, nb)
        out_refs[i][...] = x_refs[i][...] * g[None, :, :]   # (m, d, nb)
        off += d


def gate_forward(xs, fiber, *, max_block=4096, vmem_budget_bytes=12 * 1024 * 1024):
    """xs: list of arrays, xs[l] has shape (b, n, fiber[l], 2*l+1) (PyTorch layout)."""
    num_degrees = len(fiber)
    type0_dim = fiber[0]
    dim_gate = sum(fiber[1:])
    rem_dim = type0_dim - dim_gate
    assert type0_dim > dim_gate

    b, n = xs[0].shape[:2]
    N = b * n
    dtype = xs[0].dtype
    itemsize = jnp.dtype(dtype).itemsize

    # ---- block size selection (lane axis = N) ----
    # Bytes per N-column across all input and output blocks; Pallas
    # double-buffers each block, so total resident ~= 2 * bytes_per_col * blk.
    hi_cols = sum((2 * d + 1) * fiber[d] for d in range(1, num_degrees))
    bytes_per_col = (type0_dim + hi_cols + rem_dim + hi_cols) * itemsize
    blk = (vmem_budget_bytes // (2 * bytes_per_col)) // 128 * 128
    blk = int(max(128, min(blk, max_block)))
    # Don't use a block larger than (padded) N itself.
    blk = int(min(blk, pl.cdiv(N, 128) * 128))

    N_pad = pl.cdiv(N, blk) * blk
    pad = N_pad - N

    # ---- glue: convert to kernel layout (N on lanes) ----
    t0 = jnp.transpose(xs[0].reshape(N, type0_dim), (1, 0))          # (type0_dim, N)
    hi = [
        jnp.transpose(xs[d].reshape(N, fiber[d], 2 * d + 1), (2, 1, 0))  # (m, dim, N)
        for d in range(1, num_degrees)
    ]
    if pad:
        t0 = jnp.pad(t0, ((0, 0), (0, pad)))
        hi = [jnp.pad(h, ((0, 0), (0, 0), (0, pad))) for h in hi]

    grid = (N_pad // blk,)

    in_specs = [pl.BlockSpec((type0_dim, blk), lambda i: (0, i))]
    for d in range(1, num_degrees):
        m = 2 * d + 1
        in_specs.append(pl.BlockSpec((m, fiber[d], blk), lambda i: (0, 0, i)))

    out_specs = [pl.BlockSpec((rem_dim, blk), lambda i: (0, i))]
    out_shapes = [jax.ShapeDtypeStruct((rem_dim, N_pad), dtype)]
    for d in range(1, num_degrees):
        m = 2 * d + 1
        out_specs.append(pl.BlockSpec((m, fiber[d], blk), lambda i: (0, 0, i)))
        out_shapes.append(jax.ShapeDtypeStruct((m, fiber[d], N_pad), dtype))

    outs = pl.pallas_call(
        partial(_gate_kernel, fiber),
        out_shape=tuple(out_shapes),
        grid_spec=pltpu.PrefetchScalarGridSpec(
            num_scalar_prefetch=0,
            grid=grid,
            in_specs=in_specs,
            out_specs=tuple(out_specs),
        ),
        compiler_params=pltpu.CompilerParams(
            dimension_semantics=("parallel",),
        ),
    )(t0, *hi)

    # ---- glue: convert back to PyTorch layout, drop padding ----
    o0 = outs[0][:, :N]                                              # (rem_dim, N)
    output = {0: jnp.transpose(o0, (1, 0)).reshape(b, n, rem_dim, 1)}
    for d in range(1, num_degrees):
        od = outs[d][:, :, :N]                                       # (m, dim, N)
        output[d] = jnp.transpose(od, (2, 1, 0)).reshape(b, n, fiber[d], 2 * d + 1)
    return output


def _gate_reference(xs, fiber):
    """Pure-JAX reference mirroring the PyTorch forward."""
    dim_gate = sum(fiber[1:])
    t0 = xs[0]                                          # (b, n, type0_dim, 1)
    out = {0: jax.nn.silu(t0[..., dim_gate:, :])}
    off = 0
    for d in range(1, len(fiber)):
        g = t0[..., off:off + fiber[d], :]              # (b, n, fiber[d], 1)
        out[d] = xs[d] * jax.nn.sigmoid(g)
        off += fiber[d]
    return out


if __name__ == "__main__":
    fiber = (32, 8, 4)            # type-0 channels > sum of higher-degree channels
    b, n = 2, 8

    key = jax.random.PRNGKey(0)
    keys = jax.random.split(key, len(fiber))
    xs = [
        jax.random.normal(keys[d], (b, n, fiber[d], 2 * d + 1), dtype=jnp.float32)
        for d in range(len(fiber))
    ]

    out = gate_forward(xs, fiber)
    out = {k: jax.block_until_ready(v) for k, v in out.items()}

    ref = _gate_reference(xs, fiber)
    for d in ref:
        assert out[d].shape == ref[d].shape, (d, out[d].shape, ref[d].shape)
        assert jnp.allclose(out[d], ref[d], atol=1e-5, rtol=1e-5), f"mismatch at degree {d}"

    print("KERNEL_OK")
</pallas_src>

<mosaic_0001>
module attributes {stable_mosaic.version = 11 : i64} {
  func.func @_gate_kernel(%arg0: i32, %arg1: memref<32x128xf32, #tpu.memory_space<vmem>>, %arg2: memref<3x8x128xf32, #tpu.memory_space<vmem>>, %arg3: memref<5x4x128xf32, #tpu.memory_space<vmem>>, %arg4: memref<20x128xf32, #tpu.memory_space<vmem>>, %arg5: memref<3x8x128xf32, #tpu.memory_space<vmem>>, %arg6: memref<5x4x128xf32, #tpu.memory_space<vmem>>) attributes {dimension_semantics = [#tpu.dimension_semantics<parallel>], iteration_bounds = array<i64: 1>, scalar_prefetch = 0 : i64, scratch_operands = 0 : i64, tpu.core_type = #tpu.core_type<tc>, window_params = [{transform_indices = @transform_0, window_bounds = array<i64: 32, 128>}, {transform_indices = @transform_1, window_bounds = array<i64: 3, 8, 128>}, {transform_indices = @transform_2, window_bounds = array<i64: 5, 4, 128>}, {transform_indices = @transform_3, window_bounds = array<i64: 20, 128>}, {transform_indices = @transform_4, window_bounds = array<i64: 3, 8, 128>}, {transform_indices = @transform_5, window_bounds = array<i64: 5, 4, 128>}]} {
    %c0 = arith.constant 0 : index
    %c0_0 = arith.constant 0 : index
    %0 = vector.load %arg1[%c0, %c0_0] : memref<32x128xf32, #tpu.memory_space<vmem>>, vector<32x128xf32>
    %1 = vector.extract_strided_slice %0 {offsets = [12, 0], sizes = [20, 128], strides = [1, 1]} : vector<32x128xf32> to vector<20x128xf32>
    %2 = arith.negf %1 : vector<20x128xf32>
    %3 = math.exp %2 : vector<20x128xf32>
    %cst = arith.constant 1.000000e+00 : f32
    %4 = vector.broadcast %cst : f32 to vector<20x128xf32>
    %5 = arith.addf %4, %3 : vector<20x128xf32>
    %6 = arith.divf %4, %5 : vector<20x128xf32>
    %7 = arith.mulf %1, %6 : vector<20x128xf32>
    %c0_1 = arith.constant 0 : index
    %c0_2 = arith.constant 0 : index
    %8 = vector.load %arg4[%c0_1, %c0_2] : memref<20x128xf32, #tpu.memory_space<vmem>>, vector<20x128xf32>
    tpu.vector_store %arg4[%c0_1, %c0_2], %7 {strides = array<i32>} : memref<20x128xf32, #tpu.memory_space<vmem>>, vector<20x128xf32>,
    %9 = vector.extract_strided_slice %0 {offsets = [0, 0], sizes = [8, 128], strides = [1, 1]} : vector<32x128xf32> to vector<8x128xf32>
    %10 = arith.negf %9 : vector<8x128xf32>
    %11 = math.exp %10 : vector<8x128xf32>
    %cst_3 = arith.constant 1.000000e+00 : f32
    %12 = vector.broadcast %cst_3 : f32 to vector<8x128xf32>
    %13 = arith.addf %12, %11 : vector<8x128xf32>
    %14 = arith.divf %12, %13 : vector<8x128xf32>
    %c0_4 = arith.constant 0 : index
    %c0_5 = arith.constant 0 : index
    %c0_6 = arith.constant 0 : index
    %15 = vector.load %arg2[%c0_4, %c0_5, %c0_6] : memref<3x8x128xf32, #tpu.memory_space<vmem>>, vector<3x8x128xf32>
    %16 = vector.shape_cast %14 : vector<8x128xf32> to vector<1x8x128xf32>
    %17 = vector.broadcast %16 : vector<1x8x128xf32> to vector<3x8x128xf32>
    %18 = arith.mulf %15, %17 : vector<3x8x128xf32>
    %c0_7 = arith.constant 0 : index
    %c0_8 = arith.constant 0 : index
    %c0_9 = arith.constant 0 : index
    %19 = vector.load %arg5[%c0_7, %c0_8, %c0_9] : memref<3x8x128xf32, #tpu.memory_space<vmem>>, vector<3x8x128xf32>
    tpu.vector_store %arg5[%c0_7, %c0_8, %c0_9], %18 {strides = array<i32>} : memref<3x8x128xf32, #tpu.memory_space<vmem>>, vector<3x8x128xf32>,
    %20 = vector.extract_strided_slice %0 {offsets = [8, 0], sizes = [4, 128], strides = [1, 1]} : vector<32x128xf32> to vector<4x128xf32>
    %21 = arith.negf %20 : vector<4x128xf32>
    %22 = math.exp %21 : vector<4x128xf32>
    %cst_10 = arith.constant 1.000000e+00 : f32
    %23 = vector.broadcast %cst_10 : f32 to vector<4x128xf32>
    %24 = arith.addf %23, %22 : vector<4x128xf32>
    %25 = arith.divf %23, %24 : vector<4x128xf32>
    %c0_11 = arith.constant 0 : index
    %c0_12 = arith.constant 0 : index
    %c0_13 = arith.constant 0 : index
    %26 = vector.load %arg3[%c0_11, %c0_12, %c0_13] : memref<5x4x128xf32, #tpu.memory_space<vmem>>, vector<5x4x128xf32>
    %27 = vector.shape_cast %25 : vector<4x128xf32> to vector<1x4x128xf32>
    %28 = vector.broadcast %27 : vector<1x4x128xf32> to vector<5x4x128xf32>
    %29 = arith.mulf %26, %28 : vector<5x4x128xf32>
    %c0_14 = arith.constant 0 : index
    %c0_15 = arith.constant 0 : index
    %c0_16 = arith.constant 0 : index
    %30 = vector.load %arg6[%c0_14, %c0_15, %c0_16] : memref<5x4x128xf32, #tpu.memory_space<vmem>>, vector<5x4x128xf32>
    tpu.vector_store %arg6[%c0_14, %c0_15, %c0_16], %29 {strides = array<i32>} : memref<5x4x128xf32, #tpu.memory_space<vmem>>, vector<5x4x128xf32>,
    return
  }
  func.func @transform_0(%arg0: i32) -> (i32, i32) {
    %c0_i32 = arith.constant 0 : i32
    %c0_i32_0 = arith.constant 0 : i32
    return %c0_i32, %arg0 : i32, i32
  }
  func.func @transform_1(%arg0: i32) -> (i32, i32, i32) {
    %c0_i32 = arith.constant 0 : i32
    %c0_i32_0 = arith.constant 0 : i32
    %c0_i32_1 = arith.constant 0 : i32
    return %c0_i32, %c0_i32_0, %arg0 : i32, i32, i32
  }
  func.func @transform_2(%arg0: i32) -> (i32, i32, i32) {
    %c0_i32 = arith.constant 0 : i32
    %c0_i32_0 = arith.constant 0 : i32
    %c0_i32_1 = arith.constant 0 : i32
    return %c0_i32, %c0_i32_0, %arg0 : i32, i32, i32
  }
  func.func @transform_3(%arg0: i32) -> (i32, i32) {
    %c0_i32 = arith.constant 0 : i32
    %c0_i32_0 = arith.constant 0 : i32
    return %c0_i32, %arg0 : i32, i32
  }
  func.func @transform_4(%arg0: i32) -> (i32, i32, i32) {
    %c0_i32 = arith.constant 0 : i32
    %c0_i32_0 = arith.constant 0 : i32
    %c0_i32_1 = arith.constant 0 : i32
    return %c0_i32, %c0_i32_0, %arg0 : i32, i32, i32
  }
  func.func @transform_5(%arg0: i32) -> (i32, i32, i32) {
    %c0_i32 = arith.constant 0 : i32
    %c0_i32_0 = arith.constant 0 : i32
    %c0_i32_1 = arith.constant 0 : i32
    return %c0_i32, %c0_i32_0, %arg0 : i32, i32, i32
  }
}

</mosaic_0001>

<llo_original>
// kernel: tpu_custom_call.1
$region0: #{tpu_custom_call.1}
  #allocation0 [shape = 'u32[]', space=smem, size = 0x4, offset = 0x4, fixed_abs, tag = 'smem constant byte address 0x4 - core index']
  #allocation1 [shape = 'u32[144,128]{1,0:T(1,128)}', space=vmem, size = 0x12000, scoped, tag = 'internal scratch']
  %s0 = inlined_call_operand.hbm [shape: f32[32,128], index: 0, kind: input, shape index: {}]
  %s1 = inlined_call_operand.hbm [shape: f32[3,8,128], index: 1, kind: input, shape index: {}]
  %s2 = inlined_call_operand.hbm [shape: f32[5,4,128], index: 2, kind: input, shape index: {}]
  %s3 = inlined_call_operand.hbm [shape: f32[20,128], index: 3, kind: output, shape index: {0}]
  %s4 = inlined_call_operand.hbm [shape: f32[3,8,128], index: 4, kind: output, shape index: {1}]
  %s5 = inlined_call_operand.hbm [shape: f32[5,4,128], index: 5, kind: output, shape index: {2}]
  %6 = xla_tuple %s3, %s4, %s5
  %s7 = sld [smem:[#allocation0]]
  $region50: #{tpu_custom_call.1} parent=0
    _
  %s9 = ssub.s32 1, %s7
  %s10 = scalar_select 0, %s9, %s7
  $region1: #{tpu_custom_call.1} parent=0
    #allocation2 [shape = 'u8[16384]{0}', space=vmem, size = 0x4000, scoped, tag = 'input window, operand 0, single buffered']
    #allocation3 [shape = 's32[1]{0}', space=sflag, size = 0x4, scoped, tag = 'scoped memory for tpu_custom_call.1']
    #allocation4 [shape = 's32[1]{0}', space=sflag, size = 0x4, scoped, tag = 'scoped memory for tpu_custom_call.1']
    #allocation5 [shape = 'u8[12288]{0}', space=vmem, size = 0x3000, scoped, tag = 'input window, operand 1, single buffered']
    #allocation6 [shape = 's32[1]{0}', space=sflag, size = 0x4, scoped, tag = 'scoped memory for tpu_custom_call.1']
    #allocation7 [shape = 'u8[10240]{0}', space=vmem, size = 0x2800, scoped, tag = 'input window, operand 2, single buffered']
    #allocation8 [shape = 'u8[12288]{0}', space=vmem, size = 0x3000, scoped, tag = 'output window, operand 0, single buffered']
    #allocation9 [shape = 'u8[12288]{0}', space=vmem, size = 0x3000, scoped, tag = 'output window, operand 1, single buffered']
    #allocation10 [shape = 's32[1]{0}', space=sflag, size = 0x4, scoped, tag = 'scoped memory for tpu_custom_call.1']
    #allocation11 [shape = 'u8[10240]{0}', space=vmem, size = 0x2800, scoped, tag = 'output window, operand 2, single buffered']
    %11 = vsyncpa [#allocation3], 0
    %12 = vsyncpa [#allocation6], 0
    %13 = vsyncpa [#allocation4], 0
    %14 = vsyncpa [#allocation10], 0
    // Predicated region
    $region2: #{tpu_custom_call.1} parent=1 // pred_check
      _
    $region3: #{tpu_custom_call.1} parent=1 // pred_check_branch
      %16 = sbr.rel (0) target = $region5
    $region4: #{tpu_custom_call.1} parent=1 // pred_region
      %s18 = ssub.s32 512, 512
      %19 = vsyncadd [#allocation3], %s18
      %s20 = sshll.u32 [#allocation2], 4
      %s21 = int_to_ptr.vmem [resolvable:$true] %s20
      %26 = dma.hbm_to_vmem [thread:$0]  %s0, 512, %s21, [#allocation3], 128, 128, 8
    $region5: #{tpu_custom_call.1} parent=1 // pred_fallthru
      _
    // Predicated region
    $region6: #{tpu_custom_call.1} parent=1 // pred_check
      _
    $region7: #{tpu_custom_call.1} parent=1 // pred_check_branch
      %28 = sbr.rel (0) target = $region9
    $region8: #{tpu_custom_call.1} parent=1 // pred_region
      %s30 = ssub.s32 384, 384
      %31 = vsyncadd [#allocation6], %s30
      %s32 = sshll.u32 [#allocation5], 4
      %s33 = int_to_ptr.vmem [resolvable:$true] %s32
      %38 = dma.hbm_to_vmem [thread:$0]  %s1, 384, %s33, [#allocation6], 128, 128, 8
    $region9: #{tpu_custom_call.1} parent=1 // pred_fallthru
      _
    // Predicated region
    $region10: #{tpu_custom_call.1} parent=1 // pred_check
      _
    $region11: #{tpu_custom_call.1} parent=1 // pred_check_branch
      %40 = sbr.rel (0) target = $region13
    $region12: #{tpu_custom_call.1} parent=1 // pred_region
      %s42 = ssub.s32 320, 320
      %43 = vsyncadd [#allocation6], %s42
      %s44 = sshll.u32 [#allocation7], 4
      %s45 = int_to_ptr.vmem [resolvable:$true] %s44
      %50 = dma.hbm_to_vmem [thread:$0]  %s2, 320, %s45, [#allocation6], 64, 64, 4
    $region13: #{tpu_custom_call.1} parent=1 // pred_fallthru
      _
    // Predicated region
    $region14: #{tpu_custom_call.1} parent=1 // pred_check
      _
    $region15: #{tpu_custom_call.1} parent=1 // pred_check_branch
      %52 = sbr.rel (0) target = $region17
    $region16: #{tpu_custom_call.1} parent=1 // pred_region
      %53 = dma.done [#allocation3], 512
    $region17: #{tpu_custom_call.1} parent=1 // pred_fallthru
      _
    // Predicated region
    $region18: #{tpu_custom_call.1} parent=1 // pred_check
      _
    $region19: #{tpu_custom_call.1} parent=1 // pred_check_branch
      %55 = sbr.rel (0) target = $region21
    $region20: #{tpu_custom_call.1} parent=1 // pred_region
      %56 = dma.done [#allocation6], 384
    $region21: #{tpu_custom_call.1} parent=1 // pred_fallthru
      _
    // Predicated region
    $region22: #{tpu_custom_call.1} parent=1 // pred_check
      _
    $region23: #{tpu_custom_call.1} parent=1 // pred_check_branch
      %58 = sbr.rel (0) target = $region25
    $region24: #{tpu_custom_call.1} parent=1 // pred_region
      %59 = dma.done [#allocation6], 320
    $region25: #{tpu_custom_call.1} parent=1 // pred_fallthru
      _
    %v60 = vld [vmem:[#allocation2] sm:$0xff]
    %v61 = vld [vmem:[#allocation2 + $0x8] sm:$0xff]
    %v62 = vld [vmem:[#allocation2 + $0x10] sm:$0xff]
    %v63 = vld [vmem:[#allocation2 + $0x18] sm:$0xff]
    %v64 = vxor.u32 %v61, 2147483648
    %v65 = vxor.u32 %v62, 2147483648
    %v66 = vxor.u32 %v63, 2147483648
    %v67 = vmul.f32 %v64, 1.442695
    %v68 = vpow.pop %v67
    %v69 = vmul.f32 %v65, 1.442695
    %v70 = vpow.pop %v69
    %v71 = vmul.f32 %v66, 1.442695
    %v72 = vpow.pop %v71
    %v73 = vadd.f32 %v68, 1.0
    %v74 = vadd.f32 %v70, 1.0
    %v75 = vadd.f32 %v72, 1.0
    %v76 = vrcp.pop %v73
    %v77 = vmul.f32 1.0, %v76
    %v78 = vrcp.pop %v74
    %v79 = vmul.f32 1.0, %v78
    %v80 = vrcp.pop %v75
    %v81 = vmul.f32 1.0, %v80
    %v82 = vmul.f32 %v61, %v77
    %v83 = vmul.f32 %v62, %v79
    %v84 = vmul.f32 %v63, %v81
    %85 = vst [vmem:[#allocation8 - $0x4] sm:$0xf0] %v82
    %86 = vst [vmem:[#allocation8 + $0x4] sm:$0xff] %v83
    %87 = vst [vmem:[#allocation8 + $0xc] sm:$0xff] %v84
    %v88 = vxor.u32 %v60, 2147483648
    %v89 = vmul.f32 %v88, 1.442695
    %v90 = vpow.pop %v89
    %v91 = vadd.f32 %v90, 1.0
    %v92 = vrcp.pop %v91
    %v93 = vmul.f32 1.0, %v92
    %v94 = vld [vmem:[#allocation5] sm:$0xff]
    %v95 = vld [vmem:[#allocation5 + $0x8] sm:$0xff]
    %v96 = vld [vmem:[#allocation5 + $0x10] sm:$0xff]
    %v97 = vmul.f32 %v94, %v93
    %v98 = vmul.f32 %v95, %v93
    %v99 = vmul.f32 %v96, %v93
    %100 = vst [vmem:[#allocation9] sm:$0xff] %v97
    %101 = vst [vmem:[#allocation9 + $0x8] sm:$0xff] %v98
    %102 = vst [vmem:[#allocation9 + $0x10] sm:$0xff] %v99
    %v103 = vld [vmem:[#allocation7] sm:$0xf]
    %v104 = vld [vmem:[#allocation7 + $0x4] sm:$0xf]
    %v105 = vld [vmem:[#allocation7 + $0x8] sm:$0xf]
    %v106 = vld [vmem:[#allocation7 + $0xc] sm:$0xf]
    %v107 = vld [vmem:[#allocation7 + $0x10] sm:$0xf]
    %v108 = vmul.f32 %v103, %v77
    %v109 = vmul.f32 %v104, %v77
    %v110 = vmul.f32 %v105, %v77
    %v111 = vmul.f32 %v106, %v77
    %v112 = vmul.f32 %v107, %v77
    %113 = vst [vmem:[#allocation11] sm:$0xf] %v108
    %114 = vst [vmem:[#allocation11 + $0x4] sm:$0xf] %v109
    %115 = vst [vmem:[#allocation11 + $0x8] sm:$0xf] %v110
    %116 = vst [vmem:[#allocation11 + $0xc] sm:$0xf] %v111
    %117 = vst [vmem:[#allocation11 + $0x10] sm:$0xf] %v112
    // Predicated region
    $region26: #{tpu_custom_call.1} parent=1 // pred_check
      _
    $region27: #{tpu_custom_call.1} parent=1 // pred_check_branch
      %119 = sbr.rel (0) target = $region29
    $region28: #{tpu_custom_call.1} parent=1 // pred_region
      %s121 = ssub.s32 384, 384
      %122 = vsyncadd [#allocation4], %s121
      %s123 = sshll.u32 [#allocation8], 4
      %s124 = int_to_ptr.vmem [resolvable:$true] %s123
      %129 = dma.vmem_to_hbm [thread:$0]  %s124, 384, %s3, [#allocation4], 128, 128, 8
    $region29: #{tpu_custom_call.1} parent=1 // pred_fallthru
      _
    // Predicated region
    $region30: #{tpu_custom_call.1} parent=1 // pred_check
      _
    $region31: #{tpu_custom_call.1} parent=1 // pred_check_branch
      %131 = sbr.rel (0) target = $region33
    $region32: #{tpu_custom_call.1} parent=1 // pred_region
      %s133 = ssub.s32 384, 384
      %134 = vsyncadd [#allocation10], %s133
      %s135 = sshll.u32 [#allocation9], 4
      %s136 = int_to_ptr.vmem [resolvable:$true] %s135
      %141 = dma.vmem_to_hbm [thread:$0]  %s136, 384, %s4, [#allocation10], 128, 128, 8
    $region33: #{tpu_custom_call.1} parent=1 // pred_fallthru
      _
    // Predicated region
    $region34: #{tpu_custom_call.1} parent=1 // pred_check
      _
    $region35: #{tpu_custom_call.1} parent=1 // pred_check_branch
      %143 = sbr.rel (0) target = $region37
    $region36: #{tpu_custom_call.1} parent=1 // pred_region
      %s145 = ssub.s32 320, 320
      %146 = vsyncadd [#allocation10], %s145
      %s147 = sshll.u32 [#allocation11], 4
      %s148 = int_to_ptr.vmem [resolvable:$true] %s147
      %153 = dma.vmem_to_hbm [thread:$0]  %s148, 320, %s5, [#allocation10], 64, 64, 4
    $region37: #{tpu_custom_call.1} parent=1 // pred_fallthru
      _
    // Predicated region
    $region38: #{tpu_custom_call.1} parent=1 // pred_check
      _
    $region39: #{tpu_custom_call.1} parent=1 // pred_check_branch
      %155 = sbr.rel (0) target = $region41
    $region40: #{tpu_custom_call.1} parent=1 // pred_region
      %156 = dma.done [#allocation4], 384
    $region41: #{tpu_custom_call.1} parent=1 // pred_fallthru
      _
    // Predicated region
    $region42: #{tpu_custom_call.1} parent=1 // pred_check
      _
    $region43: #{tpu_custom_call.1} parent=1 // pred_check_branch
      %158 = sbr.rel (0) target = $region45
    $region44: #{tpu_custom_call.1} parent=1 // pred_region
      %159 = dma.done [#allocation10], 384
    $region45: #{tpu_custom_call.1} parent=1 // pred_fallthru
      _
    // Predicated region
    $region46: #{tpu_custom_call.1} parent=1 // pred_check
      _
    $region47: #{tpu_custom_call.1} parent=1 // pred_check_branch
      %161 = sbr.rel (0) target = $region49
    $region48: #{tpu_custom_call.1} parent=1 // pred_region
      %162 = dma.done [#allocation10], 320
    $region49: #{tpu_custom_call.1} parent=1 // pred_fallthru
      _
    %163 = vsyncpa [#allocation3], 1
    %164 = vsyncpa [#allocation6], 1
    %165 = vsyncpa [#allocation4], 1
    %166 = vsyncpa [#allocation10], 1

</llo_original>
